<compile_context>
chip_gen: v5e
topology: v5e:2x2
jax: 0.10.0
libtpu: 0.0.40
codegen_flags: <defaults>
</compile_context>

<pallas_src>
import math

import jax
import jax.numpy as jnp
from jax.experimental import pallas as pl
from jax.experimental.pallas import tpu as pltpu

BN_EPS = 1e-5


def pose_decoder_kernel(
    feat_ref,    # (B, F)
    w1_ref,      # (F, 256)
    bn1_ref,     # (2, 256)   row0 = gamma, row1 = beta
    w2_ref,      # (256, 128)
    bn2_ref,     # (2, 128)
    wh_ref,      # (128, 7P)  fused head weight, per-part cols [t0,t1,t2,q0,q1,q2,q3]
    headv_ref,   # (2, 7P)    row0 = fused bias (trans bias / quat bias + [1,0,0,0]), row1 = trans mask
    grp_ref,     # (7P, P)    1 where column c is a quat column of part p
    grpT_ref,    # (P, 7P)
    out_ref,     # (B, 7P)
):
    x = feat_ref[...]
    B = x.shape[0]
    inv_b = jnp.full((1, B), 1.0 / B, dtype=jnp.float32)  # mean-reduction row (goes to MXU)

    def bn_relu(h, bn_ref):
        # training-mode BatchNorm1d, one-pass stats on the MXU.
        m = jnp.dot(inv_b, h, preferred_element_type=jnp.float32)       # (1, N) = E[x]
        e2 = jnp.dot(inv_b, h * h, preferred_element_type=jnp.float32)  # (1, N) = E[x^2]
        v = jnp.maximum(e2 - m * m, 0.0)                                # biased variance
        g = bn_ref[0:1, :]
        b = bn_ref[1:2, :]
        s = g * jax.lax.rsqrt(v + BN_EPS)
        return jnp.maximum(h * s + (b - m * s), 0.0)

    # fc1/fc2 linear biases omitted: a per-feature bias added before train-mode BN
    # is exactly removed by the mean subtraction.
    h1 = bn_relu(jnp.dot(x, w1_ref[...], preferred_element_type=jnp.float32), bn1_ref)
    h2 = bn_relu(jnp.dot(h1, w2_ref[...], preferred_element_type=jnp.float32), bn2_ref)

    # ---- fused trans+quat head ----
    y = jnp.dot(h2, wh_ref[...], preferred_element_type=jnp.float32) + headv_ref[0:1, :]
    tmask = headv_ref[1:2, :]

    # per-part quaternion sum-of-squares via 0/1 group matmul (selects quat columns only)
    ssum = jnp.dot(y * y, grp_ref[...], preferred_element_type=jnp.float32)      # (B, P)
    inv = jax.lax.rsqrt(ssum + 1e-12)                                            # (B, P)
    inv_full = jnp.dot(inv, grpT_ref[...], preferred_element_type=jnp.float32)   # (B, 7P); 0 on trans cols

    # trans cols -> tanh(y); quat cols -> y * rsqrt(1e-12 + sum q^2)
    out_ref[...] = jnp.tanh(y) * tmask + y * inv_full


def prepare_inputs(params, num_parts):
    """One-time host-side prep: transposes, packing, constants. Not in the hot path."""
    P = num_parts
    f32 = jnp.float32

    w1 = params["w1"].T.astype(f32)                                        # (F, 256)
    w2 = params["w2"].T.astype(f32)                                        # (256, 128)
    bn1 = jnp.stack([params["bn1_g"], params["bn1_b"]]).astype(f32)        # (2, 256)
    bn2 = jnp.stack([params["bn2_g"], params["bn2_b"]]).astype(f32)        # (2, 128)

    # fused head weight: per-part column order [t0,t1,t2,q0,q1,q2,q3]
    wt_p = params["wt"].astype(f32).reshape(P, 3, -1)                      # (P, 3, 128)
    wq_p = params["wq"].astype(f32).reshape(P, 4, -1)                      # (P, 4, 128)
    wh = jnp.concatenate([wt_p, wq_p], axis=1).reshape(7 * P, -1).T        # (128, 7P)

    bt_p = params["bt"].astype(f32).reshape(P, 3)
    bq_p = params["bq"].astype(f32).reshape(P, 4) + jnp.array([1.0, 0.0, 0.0, 0.0], f32)
    bias = jnp.concatenate([bt_p, bq_p], axis=1).reshape(1, 7 * P)         # fused bias
    tmask = jnp.tile(jnp.array([1, 1, 1, 0, 0, 0, 0], f32), P).reshape(1, 7 * P)
    headv = jnp.concatenate([bias, tmask], axis=0)                         # (2, 7P)

    col_is_quat = jnp.tile(jnp.array([0, 0, 0, 1, 1, 1, 1], f32), P)       # (7P,)
    part_of_col = jnp.repeat(jnp.arange(P), 7)                             # (7P,)
    grp = (jax.nn.one_hot(part_of_col, P, dtype=f32) * col_is_quat[:, None])  # (7P, P)
    grpT = grp.T                                                           # (P, 7P)

    return (w1, bn1, w2, bn2, wh, headv, grp, grpT)


@jax.jit
def pose_decoder_forward(feat, prepped):
    w1, bn1, w2, bn2, wh, headv, grp, grpT = prepped
    B = feat.shape[0]
    out_dim = wh.shape[1]          # 7 * P
    P = out_dim // 7

    vmem = pl.BlockSpec(memory_space=pltpu.MemorySpace.VMEM)
    out2d = pl.pallas_call(
        pose_decoder_kernel,
        out_shape=jax.ShapeDtypeStruct((B, out_dim), jnp.float32),
        in_specs=[vmem] * 9,
        out_specs=vmem,
    )(feat.astype(jnp.float32), w1, bn1, w2, bn2, wh, headv, grp, grpT)

    # free reshape: columns were already laid out per-part as [t,t,t,q,q,q,q]
    return out2d.reshape(B, P, 7)


def init_params(key, feat_len, num_parts):
    """Deterministic init mirroring nn.Linear defaults; quat.bias zeroed; BN gamma=1, beta=0."""
    def linear(k, fan_in, fan_out):
        bound = 1.0 / math.sqrt(fan_in)
        kw, kb = jax.random.split(k)
        w = jax.random.uniform(kw, (fan_out, fan_in), jnp.float32, -bound, bound)
        b = jax.random.uniform(kb, (fan_out,), jnp.float32, -bound, bound)
        return w, b

    k1, k2, k3, k4 = jax.random.split(key, 4)
    w1, b1 = linear(k1, feat_len, 256)
    w2, b2 = linear(k2, 256, 128)
    wt, bt = linear(k3, 128, num_parts * 3)
    wq, _ = linear(k4, 128, num_parts * 4)
    bq = jnp.zeros((num_parts * 4,), jnp.float32)  # self.quat.bias.data.zero_()
    return {
        "w1": w1, "b1": b1, "w2": w2, "b2": b2,
        "wt": wt, "bt": bt, "wq": wq, "bq": bq,
        "bn1_g": jnp.ones((256,), jnp.float32), "bn1_b": jnp.zeros((256,), jnp.float32),
        "bn2_g": jnp.ones((128,), jnp.float32), "bn2_b": jnp.zeros((128,), jnp.float32),
    }


def pose_decoder_reference(feat, params, num_parts):
    """Pure-JAX reference (matches the PyTorch module in training mode)."""
    def bn_train(h, g, b):
        m = jnp.mean(h, axis=0, keepdims=True)
        v = jnp.mean((h - m) ** 2, axis=0, keepdims=True)
        return (h - m) / jnp.sqrt(v + BN_EPS) * g + b

    B = feat.shape[0]
    h1 = jax.nn.relu(bn_train(feat @ params["w1"].T + params["b1"], params["bn1_g"], params["bn1_b"]))
    h2 = jax.nn.relu(bn_train(h1 @ params["w2"].T + params["b2"], params["bn2_g"], params["bn2_b"]))
    trans = jnp.tanh(h2 @ params["wt"].T + params["bt"]).reshape(B, -1, 3)
    quat = (h2 @ params["wq"].T + params["bq"]).reshape(B, -1, 4)
    quat = quat + jnp.array([[[1.0, 0.0, 0.0, 0.0]]], jnp.float32)
    quat = quat / jnp.sqrt(1e-12 + jnp.sum(quat ** 2, axis=-1, keepdims=True))
    return jnp.concatenate([trans, quat], axis=-1)


if __name__ == "__main__":
    B, FEAT_LEN, NUM_PARTS = 8, 32, 4

    key = jax.random.PRNGKey(0)
    k_feat, k_params = jax.random.split(key)
    feat = jax.random.normal(k_feat, (B, FEAT_LEN), jnp.float32)
    params = init_params(k_params, FEAT_LEN, NUM_PARTS)

    prepped = prepare_inputs(params, NUM_PARTS)   # one-time; hoisted out of forward
    out = pose_decoder_forward(feat, prepped)
    out = jax.block_until_ready(out)
    assert out.shape == (B, NUM_PARTS, 7), out.shape

    ref = pose_decoder_reference(feat, params, NUM_PARTS)
    assert jnp.allclose(out, ref, rtol=1e-4, atol=1e-5), "mismatch vs reference"

    print("KERNEL_OK")
</pallas_src>

<mosaic_0001>
module attributes {stable_mosaic.version = 11 : i64} {
  func.func @pose_decoder_kernel(%arg0: memref<8x32xf32, #tpu.memory_space<vmem>>, %arg1: memref<32x256xf32, #tpu.memory_space<vmem>>, %arg2: memref<2x256xf32, #tpu.memory_space<vmem>>, %arg3: memref<256x128xf32, #tpu.memory_space<vmem>>, %arg4: memref<2x128xf32, #tpu.memory_space<vmem>>, %arg5: memref<128x28xf32, #tpu.memory_space<vmem>>, %arg6: memref<2x28xf32, #tpu.memory_space<vmem>>, %arg7: memref<28x4xf32, #tpu.memory_space<vmem>>, %arg8: memref<4x28xf32, #tpu.memory_space<vmem>>, %arg9: memref<8x28xf32, #tpu.memory_space<vmem>>) attributes {dimension_semantics = [], scalar_prefetch = 0 : i64, scratch_operands = 0 : i64, tpu.core_type = #tpu.core_type<tc>} {
    %c0 = arith.constant 0 : index
    %c0_0 = arith.constant 0 : index
    %0 = vector.load %arg0[%c0, %c0_0] : memref<8x32xf32, #tpu.memory_space<vmem>>, vector<8x32xf32>
    %cst = arith.constant 1.250000e-01 : f32
    %1 = vector.broadcast %cst : f32 to vector<1x8xf32>
    %c0_1 = arith.constant 0 : index
    %c0_2 = arith.constant 0 : index
    %2 = vector.load %arg1[%c0_1, %c0_2] : memref<32x256xf32, #tpu.memory_space<vmem>>, vector<32x256xf32>
    %cst_3 = arith.constant dense<0.000000e+00> : vector<8x256xf32>
    %3 = tpu.matmul %0, %2, %cst_3 {dimension_numbers = #tpu.dot_dimension_numbers<[1], [0], [0], [1], [0, 0, 1, 1], [], []>} : vector<8x32xf32>, vector<32x256xf32>, vector<8x256xf32> -> vector<8x256xf32>
    %cst_4 = arith.constant dense<0.000000e+00> : vector<1x256xf32>
    %4 = tpu.matmul %1, %3, %cst_4 {dimension_numbers = #tpu.dot_dimension_numbers<[1], [0], [0], [1], [0, 0, 1, 1], [], []>} : vector<1x8xf32>, vector<8x256xf32>, vector<1x256xf32> -> vector<1x256xf32>
    %5 = arith.mulf %3, %3 : vector<8x256xf32>
    %cst_5 = arith.constant dense<0.000000e+00> : vector<1x256xf32>
    %6 = tpu.matmul %1, %5, %cst_5 {dimension_numbers = #tpu.dot_dimension_numbers<[1], [0], [0], [1], [0, 0, 1, 1], [], []>} : vector<1x8xf32>, vector<8x256xf32>, vector<1x256xf32> -> vector<1x256xf32>
    %7 = arith.mulf %4, %4 : vector<1x256xf32>
    %8 = arith.subf %6, %7 : vector<1x256xf32>
    %cst_6 = arith.constant 0.000000e+00 : f32
    %9 = vector.broadcast %cst_6 : f32 to vector<1x256xf32>
    %10 = arith.maximumf %8, %9 : vector<1x256xf32>
    %c0_7 = arith.constant 0 : index
    %c0_8 = arith.constant 0 : index
    %11 = vector.load %arg2[%c0_7, %c0_8] : memref<2x256xf32, #tpu.memory_space<vmem>>, vector<1x256xf32>
    %c1 = arith.constant 1 : index
    %c0_9 = arith.constant 0 : index
    %12 = vector.load %arg2[%c1, %c0_9] : memref<2x256xf32, #tpu.memory_space<vmem>>, vector<1x256xf32>
    %cst_10 = arith.constant 9.99999974E-6 : f32
    %13 = vector.broadcast %cst_10 : f32 to vector<1x256xf32>
    %14 = arith.addf %10, %13 : vector<1x256xf32>
    %15 = math.rsqrt %14 : vector<1x256xf32>
    %16 = arith.mulf %11, %15 : vector<1x256xf32>
    %17 = vector.broadcast %16 : vector<1x256xf32> to vector<8x256xf32>
    %18 = arith.mulf %3, %17 : vector<8x256xf32>
    %19 = arith.mulf %4, %16 : vector<1x256xf32>
    %20 = arith.subf %12, %19 : vector<1x256xf32>
    %21 = vector.broadcast %20 : vector<1x256xf32> to vector<8x256xf32>
    %22 = arith.addf %18, %21 : vector<8x256xf32>
    %cst_11 = arith.constant 0.000000e+00 : f32
    %23 = vector.broadcast %cst_11 : f32 to vector<8x256xf32>
    %24 = arith.maximumf %22, %23 : vector<8x256xf32>
    %c0_12 = arith.constant 0 : index
    %c0_13 = arith.constant 0 : index
    %25 = vector.load %arg3[%c0_12, %c0_13] : memref<256x128xf32, #tpu.memory_space<vmem>>, vector<256x128xf32>
    %cst_14 = arith.constant dense<0.000000e+00> : vector<8x128xf32>
    %26 = tpu.matmul %24, %25, %cst_14 {dimension_numbers = #tpu.dot_dimension_numbers<[1], [0], [0], [1], [0, 0, 1, 1], [], []>} : vector<8x256xf32>, vector<256x128xf32>, vector<8x128xf32> -> vector<8x128xf32>
    %cst_15 = arith.constant dense<0.000000e+00> : vector<1x128xf32>
    %27 = tpu.matmul %1, %26, %cst_15 {dimension_numbers = #tpu.dot_dimension_numbers<[1], [0], [0], [1], [0, 0, 1, 1], [], []>} : vector<1x8xf32>, vector<8x128xf32>, vector<1x128xf32> -> vector<1x128xf32>
    %28 = arith.mulf %26, %26 : vector<8x128xf32>
    %cst_16 = arith.constant dense<0.000000e+00> : vector<1x128xf32>
    %29 = tpu.matmul %1, %28, %cst_16 {dimension_numbers = #tpu.dot_dimension_numbers<[1], [0], [0], [1], [0, 0, 1, 1], [], []>} : vector<1x8xf32>, vector<8x128xf32>, vector<1x128xf32> -> vector<1x128xf32>
    %30 = arith.mulf %27, %27 : vector<1x128xf32>
    %31 = arith.subf %29, %30 : vector<1x128xf32>
    %cst_17 = arith.constant 0.000000e+00 : f32
    %32 = vector.broadcast %cst_17 : f32 to vector<1x128xf32>
    %33 = arith.maximumf %31, %32 : vector<1x128xf32>
    %c0_18 = arith.constant 0 : index
    %c0_19 = arith.constant 0 : index
    %34 = vector.load %arg4[%c0_18, %c0_19] : memref<2x128xf32, #tpu.memory_space<vmem>>, vector<1x128xf32>
    %c1_20 = arith.constant 1 : index
    %c0_21 = arith.constant 0 : index
    %35 = vector.load %arg4[%c1_20, %c0_21] : memref<2x128xf32, #tpu.memory_space<vmem>>, vector<1x128xf32>
    %cst_22 = arith.constant 9.99999974E-6 : f32
    %36 = vector.broadcast %cst_22 : f32 to vector<1x128xf32>
    %37 = arith.addf %33, %36 : vector<1x128xf32>
    %38 = math.rsqrt %37 : vector<1x128xf32>
    %39 = arith.mulf %34, %38 : vector<1x128xf32>
    %40 = vector.broadcast %39 : vector<1x128xf32> to vector<8x128xf32>
    %41 = arith.mulf %26, %40 : vector<8x128xf32>
    %42 = arith.mulf %27, %39 : vector<1x128xf32>
    %43 = arith.subf %35, %42 : vector<1x128xf32>
    %44 = vector.broadcast %43 : vector<1x128xf32> to vector<8x128xf32>
    %45 = arith.addf %41, %44 : vector<8x128xf32>
    %cst_23 = arith.constant 0.000000e+00 : f32
    %46 = vector.broadcast %cst_23 : f32 to vector<8x128xf32>
    %47 = arith.maximumf %45, %46 : vector<8x128xf32>
    %c0_24 = arith.constant 0 : index
    %c0_25 = arith.constant 0 : index
    %48 = vector.load %arg5[%c0_24, %c0_25] : memref<128x28xf32, #tpu.memory_space<vmem>>, vector<128x28xf32>
    %cst_26 = arith.constant dense<0.000000e+00> : vector<8x28xf32>
    %49 = tpu.matmul %47, %48, %cst_26 {dimension_numbers = #tpu.dot_dimension_numbers<[1], [0], [0], [1], [0, 0, 1, 1], [], []>} : vector<8x128xf32>, vector<128x28xf32>, vector<8x28xf32> -> vector<8x28xf32>
    %c0_27 = arith.constant 0 : index
    %c0_28 = arith.constant 0 : index
    %50 = vector.load %arg6[%c0_27, %c0_28] : memref<2x28xf32, #tpu.memory_space<vmem>>, vector<1x28xf32>
    %51 = vector.broadcast %50 : vector<1x28xf32> to vector<8x28xf32>
    %52 = arith.addf %49, %51 : vector<8x28xf32>
    %c1_29 = arith.constant 1 : index
    %c0_30 = arith.constant 0 : index
    %53 = vector.load %arg6[%c1_29, %c0_30] : memref<2x28xf32, #tpu.memory_space<vmem>>, vector<1x28xf32>
    %54 = arith.mulf %52, %52 : vector<8x28xf32>
    %c0_31 = arith.constant 0 : index
    %c0_32 = arith.constant 0 : index
    %55 = vector.load %arg7[%c0_31, %c0_32] : memref<28x4xf32, #tpu.memory_space<vmem>>, vector<28x4xf32>
    %cst_33 = arith.constant dense<0.000000e+00> : vector<8x4xf32>
    %56 = tpu.matmul %54, %55, %cst_33 {dimension_numbers = #tpu.dot_dimension_numbers<[1], [0], [0], [1], [0, 0, 1, 1], [], []>} : vector<8x28xf32>, vector<28x4xf32>, vector<8x4xf32> -> vector<8x4xf32>
    %cst_34 = arith.constant 9.99999996E-13 : f32
    %57 = vector.broadcast %cst_34 : f32 to vector<8x4xf32>
    %58 = arith.addf %56, %57 : vector<8x4xf32>
    %59 = math.rsqrt %58 : vector<8x4xf32>
    %c0_35 = arith.constant 0 : index
    %c0_36 = arith.constant 0 : index
    %60 = vector.load %arg8[%c0_35, %c0_36] : memref<4x28xf32, #tpu.memory_space<vmem>>, vector<4x28xf32>
    %cst_37 = arith.constant dense<0.000000e+00> : vector<8x28xf32>
    %61 = tpu.matmul %59, %60, %cst_37 {dimension_numbers = #tpu.dot_dimension_numbers<[1], [0], [0], [1], [0, 0, 1, 1], [], []>} : vector<8x4xf32>, vector<4x28xf32>, vector<8x28xf32> -> vector<8x28xf32>
    %62 = math.tanh %52 : vector<8x28xf32>
    %63 = vector.broadcast %53 : vector<1x28xf32> to vector<8x28xf32>
    %64 = arith.mulf %62, %63 : vector<8x28xf32>
    %65 = arith.mulf %52, %61 : vector<8x28xf32>
    %66 = arith.addf %64, %65 : vector<8x28xf32>
    %c0_38 = arith.constant 0 : index
    %c0_39 = arith.constant 0 : index
    %67 = vector.load %arg9[%c0_38, %c0_39] : memref<8x28xf32, #tpu.memory_space<vmem>>, vector<8x28xf32>
    tpu.vector_store %arg9[%c0_38, %c0_39], %66 {strides = array<i32>} : memref<8x28xf32, #tpu.memory_space<vmem>>, vector<8x28xf32>,
    return
  }
}

</mosaic_0001>

<llo_original>
// kernel: pose_decoder_forward.1
$region0: #{pose_decoder_forward.1}
  #allocation0 [shape = 'u32[]', space=smem, size = 0x4, offset = 0x4, fixed_abs, tag = 'smem constant byte address 0x4 - core index']
  #allocation1 [shape = 'u32[72,128]{1,0:T(1,128)}', space=vmem, size = 0x9000, scoped, tag = 'internal scratch']
  %s0 = inlined_call_operand.vmem [shape: f32[8,32], index: 0, kind: input, shape index: {}]
  %s1 = inlined_call_operand.vmem [shape: f32[32,256], index: 1, kind: input, shape index: {}]
  %s2 = inlined_call_operand.vmem [shape: f32[2,256], index: 2, kind: input, shape index: {}]
  %s3 = inlined_call_operand.hbm [shape: f32[256,128], index: 3, kind: input, shape index: {}]
  %s4 = inlined_call_operand.vmem [shape: f32[2,128], index: 4, kind: input, shape index: {}]
  %s5 = inlined_call_operand.vmem [shape: f32[128,28], index: 5, kind: input, shape index: {}]
  %s6 = inlined_call_operand.vmem [shape: f32[2,28], index: 6, kind: input, shape index: {}]
  %s7 = inlined_call_operand.vmem [shape: f32[28,4], index: 7, kind: input, shape index: {}]
  %s8 = inlined_call_operand.vmem [shape: f32[4,28], index: 8, kind: input, shape index: {}]
  %s9 = inlined_call_operand.vmem [shape: f32[8,28], index: 9, kind: output, shape index: {}]
  %s10 = sld [smem:[#allocation0]]
  $region50: #{pose_decoder_forward.1} parent=0
    _
  %s12 = ssub.s32 1, %s10
  %s13 = scalar_select 0, %s12, %s10
  $region1: #{pose_decoder_forward.1} parent=0
    #allocation2 [shape = 'u8[131072]{0}', space=vmem, size = 0x20000, scoped, tag = 'input window, operand 3, single buffered']
    #allocation3 [shape = 's32[1]{0}', space=sflag, size = 0x4, scoped, tag = 'scoped memory for pose_decoder_forward.1']
    %14 = vsyncpa [#allocation3], 0
    // Predicated region
    $region2: #{pose_decoder_forward.1} parent=1 // pred_check
      _
    $region3: #{pose_decoder_forward.1} parent=1 // pred_check_branch
      %16 = sbr.rel (0) target = $region5
    $region4: #{pose_decoder_forward.1} parent=1 // pred_region
      _
    $region5: #{pose_decoder_forward.1} parent=1 // pred_fallthru
      _
    // Predicated region
    $region6: #{pose_decoder_forward.1} parent=1 // pred_check
      _
    $region7: #{pose_decoder_forward.1} parent=1 // pred_check_branch
      %18 = sbr.rel (0) target = $region9
    $region8: #{pose_decoder_forward.1} parent=1 // pred_region
      _
    $region9: #{pose_decoder_forward.1} parent=1 // pred_fallthru
      _
    // Predicated region
    $region10: #{pose_decoder_forward.1} parent=1 // pred_check
      _
    $region11: #{pose_decoder_forward.1} parent=1 // pred_check_branch
      %20 = sbr.rel (0) target = $region13
    $region12: #{pose_decoder_forward.1} parent=1 // pred_region
      _
    $region13: #{pose_decoder_forward.1} parent=1 // pred_fallthru
      _
    // Predicated region
    $region14: #{pose_decoder_forward.1} parent=1 // pred_check
      _
    $region15: #{pose_decoder_forward.1} parent=1 // pred_check_branch
      %22 = sbr.rel (0) target = $region17
    $region16: #{pose_decoder_forward.1} parent=1 // pred_region
      %24 = vsyncadd [#allocation3], 0
      %s25 = sshll.u32 %s3, 4
      %s26 = int_to_ptr.hbm [resolvable:$true] %s25
      %s27 = sshll.u32 [#allocation2], 4
      %s28 = int_to_ptr.vmem [resolvable:$true] %s27
      %33 = dma.hbm_to_vmem [thread:$0]  %s26, 4096, %s28, [#allocation3], 128, 128, 8
    $region17: #{pose_decoder_forward.1} parent=1 // pred_fallthru
      _
    // Predicated region
    $region18: #{pose_decoder_forward.1} parent=1 // pred_check
      _
    $region19: #{pose_decoder_forward.1} parent=1 // pred_check_branch
      %35 = sbr.rel (0) target = $region21
    $region20: #{pose_decoder_forward.1} parent=1 // pred_region
      _
    $region21: #{pose_decoder_forward.1} parent=1 // pred_fallthru
      _
    // Predicated region
    $region22: #{pose_decoder_forward.1} parent=1 // pred_check
      _
    $region23: #{pose_decoder_forward.1} parent=1 // pred_check_branch
      %37 = sbr.rel (0) target = $region25
    $region24: #{pose_decoder_forward.1} parent=1 // pred_region
      _
    $region25: #{pose_decoder_forward.1} parent=1 // pred_fallthru
      _
    // Predicated region
    $region26: #{pose_decoder_forward.1} parent=1 // pred_check
      _
    $region27: #{pose_decoder_forward.1} parent=1 // pred_check_branch
      %39 = sbr.rel (0) target = $region29
    $region28: #{pose_decoder_forward.1} parent=1 // pred_region
      _
    $region29: #{pose_decoder_forward.1} parent=1 // pred_fallthru
      _
    // Predicated region
    $region30: #{pose_decoder_forward.1} parent=1 // pred_check
      _
    $region31: #{pose_decoder_forward.1} parent=1 // pred_check_branch
      %41 = sbr.rel (0) target = $region33
    $region32: #{pose_decoder_forward.1} parent=1 // pred_region
      _
    $region33: #{pose_decoder_forward.1} parent=1 // pred_fallthru
      _
    // Predicated region
    $region34: #{pose_decoder_forward.1} parent=1 // pred_check
      _
    $region35: #{pose_decoder_forward.1} parent=1 // pred_check_branch
      %43 = sbr.rel (0) target = $region37
    $region36: #{pose_decoder_forward.1} parent=1 // pred_region
      _
    $region37: #{pose_decoder_forward.1} parent=1 // pred_fallthru
      _
    // Predicated region
    $region38: #{pose_decoder_forward.1} parent=1 // pred_check
      _
    $region39: #{pose_decoder_forward.1} parent=1 // pred_check_branch
      %45 = sbr.rel (0) target = $region41
    $region40: #{pose_decoder_forward.1} parent=1 // pred_region
      %47 = dma.done [#allocation3], 4096
    $region41: #{pose_decoder_forward.1} parent=1 // pred_fallthru
      _
    %v48 = vld [vmem:[%s0] sm:$0xff]
    %v49 = vld [vmem:[%s1] sm:$0xff]
    %v50 = vld [vmem:[%s1 + $0x8] sm:$0xff]
    %v51 = vld [vmem:[%s1 + $0x10] sm:$0xff]
    %v52 = vld [vmem:[%s1 + $0x18] sm:$0xff]
    %v53 = vld [vmem:[%s1 + $0x20] sm:$0xff]
    %v54 = vld [vmem:[%s1 + $0x28] sm:$0xff]
    %v55 = vld [vmem:[%s1 + $0x30] sm:$0xff]
    %v56 = vld [vmem:[%s1 + $0x38] sm:$0xff]
    %vm57 = vcmask 261120
    %v59 = vsel %vm57, %v48, 0
    %61 = vmatpush.msra.mxu0 0.0
    %62 = vmatpush.msra.mxu0 0.0
    %63 = vmatpush.msra.mxu0 0.0
    %64 = vmatpush.msra.mxu0 0.0
    %65 = vmatpush.msra.mxu0 0.0
    %66 = vmatpush.msra.mxu0 0.0
    %67 = vmatpush.msra.mxu0 0.0
    %68 = vmatpush.msra.mxu0 0.0
    %69 = vmatpush.msra.mxu0 0.0
    %70 = vmatpush.msra.mxu0 0.0
    %71 = vmatpush.msra.mxu0 0.0
    %72 = vmatpush.msra.mxu0 0.0
    %73 = vmatpush.msra.mxu0 %v55
    %74 = vmatpush.msra.mxu0 %v53
    %75 = vmatpush.msra.mxu0 %v51
    %76 = vmatpush.msra.mxu0 %v49
    %77 = vmatmul.f32.gmra.mxu0 %v59
    %v78 = vpop.f32.mrf.mxu0
    %v79 = vadd.f32 0.0, %v78
    %80 = vdwg.mxu0
    %81 = vmatpush.msra.mxu0 0.0
    %82 = vmatpush.msra.mxu0 0.0
    %83 = vmatpush.msra.mxu0 0.0
    %84 = vmatpush.msra.mxu0 0.0
    %85 = vmatpush.msra.mxu0 0.0
    %86 = vmatpush.msra.mxu0 0.0
    %87 = vmatpush.msra.mxu0 0.0
    %88 = vmatpush.msra.mxu0 0.0
    %89 = vmatpush.msra.mxu0 0.0
    %90 = vmatpush.msra.mxu0 0.0
    %91 = vmatpush.msra.mxu0 0.0
    %92 = vmatpush.msra.mxu0 0.0
    %93 = vmatpush.msra.mxu0 %v56
    %94 = vmatpush.msra.mxu0 %v54
    %95 = vmatpush.msra.mxu0 %v52
    %96 = vmatpush.msra.mxu0 %v50
    %97 = vmatmul.f32.gmra.mxu0 %v59
    %v98 = vpop.f32.mrf.mxu0
    %v99 = vadd.f32 0.0, %v98
    %100 = vdwg.mxu0
    %vm101 = vcmask 64512
    %v103 = vsel %vm101, 0.125, 0
    %105 = vmatpush.msra.mxu0 0.0
    %106 = vmatpush.msra.mxu0 0.0
    %107 = vmatpush.msra.mxu0 0.0
    %108 = vmatpush.msra.mxu0 0.0
    %109 = vmatpush.msra.mxu0 0.0
    %110 = vmatpush.msra.mxu0 0.0
    %111 = vmatpush.msra.mxu0 0.0
    %112 = vmatpush.msra.mxu0 0.0
    %113 = vmatpush.msra.mxu0 0.0
    %114 = vmatpush.msra.mxu0 0.0
    %115 = vmatpush.msra.mxu0 0.0
    %116 = vmatpush.msra.mxu0 0.0
    %117 = vmatpush.msra.mxu0 0.0
    %118 = vmatpush.msra.mxu0 0.0
    %119 = vmatpush.msra.mxu0 0.0
    %120 = vmatpush.msra.mxu0 %v79
    %121 = vmatmul.f32.gmra.mxu0 %v103
    %v122 = vpop.f32.mrf.mxu0
    %v123 = vadd.f32 0.0, %v122
    %124 = vdwg.mxu0
    %125 = vmatpush.msra.mxu0 0.0
    %126 = vmatpush.msra.mxu0 0.0
    %127 = vmatpush.msra.mxu0 0.0
    %128 = vmatpush.msra.mxu0 0.0
    %129 = vmatpush.msra.mxu0 0.0
    %130 = vmatpush.msra.mxu0 0.0
    %131 = vmatpush.msra.mxu0 0.0
    %132 = vmatpush.msra.mxu0 0.0
    %133 = vmatpush.msra.mxu0 0.0
    %134 = vmatpush.msra.mxu0 0.0
    %135 = vmatpush.msra.mxu0 0.0
    %136 = vmatpush.msra.mxu0 0.0
    %137 = vmatpush.msra.mxu0 0.0
    %138 = vmatpush.msra.mxu0 0.0
    %139 = vmatpush.msra.mxu0 0.0
    %140 = vmatpush.msra.mxu0 %v99
    %141 = vmatmul.f32.gmra.mxu0 %v103
    %v142 = vpop.f32.mrf.mxu0
    %v143 = vadd.f32 0.0, %v142
    %144 = vdwg.mxu0
    %v145 = vmul.f32 %v79, %v79
    %v146 = vmul.f32 %v99, %v99
    %147 = vmatpush.msra.mxu0 0.0
    %148 = vmatpush.msra.mxu0 0.0
    %149 = vmatpush.msra.mxu0 0.0
    %150 = vmatpush.msra.mxu0 0.0
    %151 = vmatpush.msra.mxu0 0.0
    %152 = vmatpush.msra.mxu0 0.0
    %153 = vmatpush.msra.mxu0 0.0
    %154 = vmatpush.msra.mxu0 0.0
    %155 = vmatpush.msra.mxu0 0.0
    %156 = vmatpush.msra.mxu0 0.0
    %157 = vmatpush.msra.mxu0 0.0
    %158 = vmatpush.msra.mxu0 0.0
    %159 = vmatpush.msra.mxu0 0.0
    %160 = vmatpush.msra.mxu0 0.0
    %161 = vmatpush.msra.mxu0 0.0
    %162 = vmatpush.msra.mxu0 %v145
    %163 = vmatmul.f32.gmra.mxu0 %v103
    %v164 = vpop.f32.mrf.mxu0
    %v165 = vadd.f32 0.0, %v164
    %166 = vdwg.mxu0
    %167 = vmatpush.msra.mxu0 0.0
    %168 = vmatpush.msra.mxu0 0.0
    %169 = vmatpush.msra.mxu0 0.0
    %170 = vmatpush.msra.mxu0 0.0
    %171 = vmatpush.msra.mxu0 0.0
    %172 = vmatpush.msra.mxu0 0.0
    %173 = vmatpush.msra.mxu0 0.0
    %174 = vmatpush.msra.mxu0 0.0
    %175 = vmatpush.msra.mxu0 0.0
    %176 = vmatpush.msra.mxu0 0.0
    %177 = vmatpush.msra.mxu0 0.0
    %178 = vmatpush.msra.mxu0 0.0
    %179 = vmatpush.msra.mxu0 0.0
    %180 = vmatpush.msra.mxu0 0.0
    %181 = vmatpush.msra.mxu0 0.0
    %182 = vmatpush.msra.mxu0 %v146
    %183 = vmatmul.f32.gmra.mxu0 %v103
    %v184 = vpop.f32.mrf.mxu0
    %v185 = vadd.f32 0.0, %v184
    %186 = vdwg.mxu0
    %v187 = vmul.f32 %v123, %v123
    %v188 = vmul.f32 %v143, %v143
    %v189 = vsub.f32 %v165, %v187
    %v190 = vsub.f32 %v185, %v188
    %v191 = vmax.f32 %v189, 0.0
    %v192 = vmax.f32 %v190, 0.0
    %v193 = vld [vmem:[%s2] ss:$2 sm:$0x3]
    %s194 = scalar_lea.vmem %s2, 1
    %v195 = vld [vmem:[%s194] ss:$2 sm:$0x3]
    %v196 = vadd.f32 %v191, 1e-05
    %v197 = vadd.f32 %v192, 1e-05
    %v198 = vrsqrt.pop %v196
    %v199 = vmul.f32 %v198, %v196
    %v200 = vmul.f32 %v199, %v198
    %v201 = vmul.f32 0.5, %v200
    %v202 = vsub.f32 1.5, %v201
    %v203 = vmul.f32 %v198, %v202
    %vm204 = vweird.f32 %v196
    %vm205 = vweird.f32 %v198
    %vm206 = vmor %vm204, %vm205
    %v207 = vsel %vm206, %v198, %v203
    %v208 = vrsqrt.pop %v197
    %v209 = vmul.f32 %v208, %v197
    %v210 = vmul.f32 %v209, %v208
    %v211 = vmul.f32 0.5, %v210
    %v212 = vsub.f32 1.5, %v211
    %v213 = vmul.f32 %v208, %v212
    %vm214 = vweird.f32 %v197
    %vm215 = vweird.f32 %v208
    %vm216 = vmor %vm214, %vm215
    %v217 = vsel %vm216, %v208, %v213
    %v220 = vrot.slane %v217, 7
    %vm221 = vcmask 1040384
    %v222 = vsel %vm221, %v207, %v220
    %v224 = vmul.f32 %v193, %v222
    %v226 = vperm.slane %v224, 0
    %v227 = vperm.slane %v224, 1
    %v230 = vmul.f32 %v79, %v226
    %v231 = vmul.f32 %v99, %v227
    %v232 = vmul.f32 %v123, %v226
    %v233 = vmul.f32 %v143, %v227
    %v236 = vrot.slane %v233, 7
    %v237 = vsel %vm221, %v232, %v236
    %v239 = vsub.f32 %v195, %v237
    %v241 = vperm.slane %v239, 0
    %v242 = vperm.slane %v239, 1
    %v245 = vadd.f32 %v230, %v241
    %v246 = vadd.f32 %v231, %v242
    %v247 = vmax.f32 %v245, 0.0
    %v248 = vmax.f32 %v246, 0.0
    %v249 = vld [vmem:[#allocation2] sm:$0xff]
    %v250 = vld [vmem:[#allocation2 + $0x8] sm:$0xff]
    %v251 = vld [vmem:[#allocation2 + $0x10] sm:$0xff]
    %v252 = vld [vmem:[#allocation2 + $0x18] sm:$0xff]
    %v253 = vld [vmem:[#allocation2 + $0x20] sm:$0xff]
    %v254 = vld [vmem:[#allocation2 + $0x28] sm:$0xff]
    %v255 = vld [vmem:[#allocation2 + $0x30] sm:$0xff]
    %v256 = vld [vmem:[#allocation2 + $0x38] sm:$0xff]
    %v257 = vld [vmem:[#allocation2 + $0x40] sm:$0xff]
    %v258 = vld [vmem:[#allocation2 + $0x48] sm:$0xff]
    %v259 = vld [vmem:[#allocation2 + $0x50] sm:$0xff]
    %v260 = vld [vmem:[#allocation2 + $0x58] sm:$0xff]
    %v261 = vld [vmem:[#allocation2 + $0x60] sm:$0xff]
    %v262 = vld [vmem:[#allocation2 + $0x68] sm:$0xff]
    %v263 = vld [vmem:[#allocation2 + $0x70] sm:$0xff]
    %v264 = vld [vmem:[#allocation2 + $0x78] sm:$0xff]
    %v265 = vld [vmem:[#allocation2 + $0x80] sm:$0xff]
    %v266 = vld [vmem:[#allocation2 + $0x88] sm:$0xff]
    %v267 = vld [vmem:[#allocation2 + $0x90] sm:$0xff]
    %v268 = vld [vmem:[#allocation2 + $0x98] sm:$0xff]
    %v269 = vld [vmem:[#allocation2 + $0xa0] sm:$0xff]
    %v270 = vld [vmem:[#allocation2 + $0xa8] sm:$0xff]
    %v271 = vld [vmem:[#allocation2 + $0xb0] sm:$0xff]
    %v272 = vld [vmem:[#allocation2 + $0xb8] sm:$0xff]
    %v273 = vld [vmem:[#allocation2 + $0xc0] sm:$0xff]
    %v274 = vld [vmem:[#allocation2 + $0xc8] sm:$0xff]
    %v275 = vld [vmem:[#allocation2 + $0xd0] sm:$0xff]
    %v276 = vld [vmem:[#allocation2 + $0xd8] sm:$0xff]
    %v277 = vld [vmem:[#allocation2 + $0xe0] sm:$0xff]
    %v278 = vld [vmem:[#allocation2 + $0xe8] sm:$0xff]
    %v279 = vld [vmem:[#allocation2 + $0xf0] sm:$0xff]
    %v280 = vld [vmem:[#allocation2 + $0xf8] sm:$0xff]
    %281 = vmatpush.msra.mxu0 %v264
    %282 = vmatpush.msra.mxu0 %v263
    %283 = vmatpush.msra.mxu0 %v262
    %284 = vmatpush.msra.mxu0 %v261
    %285 = vmatpush.msra.mxu0 %v260
    %286 = vmatpush.msra.mxu0 %v259
    %287 = vmatpush.msra.mxu0 %v258
    %288 = vmatpush.msra.mxu0 %v257
    %289 = vmatpush.msra.mxu0 %v256
    %290 = vmatpush.msra.mxu0 %v255
    %291 = vmatpush.msra.mxu0 %v254
    %292 = vmatpush.msra.mxu0 %v253
    %293 = vmatpush.msra.mxu0 %v252
    %294 = vmatpush.msra.mxu0 %v251
    %295 = vmatpush.msra.mxu0 %v250
    %296 = vmatpush.msra.mxu0 %v249
    %297 = vmatmul.f32.gmra.mxu0 %v247
    %v298 = vpop.f32.mrf.mxu0
    %v299 = vadd.f32 0.0, %v298
    %300 = vdwg.mxu0
    %301 = vmatpush.msra.mxu0 %v280
    %302 = vmatpush.msra.mxu0 %v279
    %303 = vmatpush.msra.mxu0 %v278
    %304 = vmatpush.msra.mxu0 %v277
    %305 = vmatpush.msra.mxu0 %v276
    %306 = vmatpush.msra.mxu0 %v275
    %307 = vmatpush.msra.mxu0 %v274
    %308 = vmatpush.msra.mxu0 %v273
    %309 = vmatpush.msra.mxu0 %v272
    %310 = vmatpush.msra.mxu0 %v271
    %311 = vmatpush.msra.mxu0 %v270
    %312 = vmatpush.msra.mxu0 %v269
    %313 = vmatpush.msra.mxu0 %v268
    %314 = vmatpush.msra.mxu0 %v267
    %315 = vmatpush.msra.mxu0 %v266
    %316 = vmatpush.msra.mxu0 %v265
    %317 = vmatmul.f32.gmra.mxu0 %v248
    %v318 = vpop.f32.mrf.mxu0
    %v319 = vadd.f32 %v299, %v318
    %320 = vdwg.mxu0
    %321 = vmatpush.msra.mxu0 0.0
    %322 = vmatpush.msra.mxu0 0.0
    %323 = vmatpush.msra.mxu0 0.0
    %324 = vmatpush.msra.mxu0 0.0
    %325 = vmatpush.msra.mxu0 0.0
    %326 = vmatpush.msra.mxu0 0.0
    %327 = vmatpush.msra.mxu0 0.0
    %328 = vmatpush.msra.mxu0 0.0
    %329 = vmatpush.msra.mxu0 0.0
    %330 = vmatpush.msra.mxu0 0.0
    %331 = vmatpush.msra.mxu0 0.0
    %332 = vmatpush.msra.mxu0 0.0
    %333 = vmatpush.msra.mxu0 0.0
    %334 = vmatpush.msra.mxu0 0.0
    %335 = vmatpush.msra.mxu0 0.0
    %336 = vmatpush.msra.mxu0 %v319
    %337 = vmatmul.f32.gmra.mxu0 %v103
    %v338 = vpop.f32.mrf.mxu0
    %v339 = vadd.f32 0.0, %v338
    %340 = vdwg.mxu0
    %v341 = vmul.f32 %v319, %v319
    %342 = vmatpush.msra.mxu0 0.0
    %343 = vmatpush.msra.mxu0 0.0
    %344 = vmatpush.msra.mxu0 0.0
    %345 = vmatpush.msra.mxu0 0.0
    %346 = vmatpush.msra.mxu0 0.0
    %347 = vmatpush.msra.mxu0 0.0
    %348 = vmatpush.msra.mxu0 0.0
    %349 = vmatpush.msra.mxu0 0.0
    %350 = vmatpush.msra.mxu0 0.0
    %351 = vmatpush.msra.mxu0 0.0
    %352 = vmatpush.msra.mxu0 0.0
    %353 = vmatpush.msra.mxu0 0.0
    %354 = vmatpush.msra.mxu0 0.0
    %355 = vmatpush.msra.mxu0 0.0
    %356 = vmatpush.msra.mxu0 0.0
    %357 = vmatpush.msra.mxu0 %v341
    %358 = vmatmul.f32.gmra.mxu0 %v103
    %v359 = vpop.f32.mrf.mxu0
    %v360 = vadd.f32 0.0, %v359
    %361 = vdwg.mxu0
    %v362 = vmul.f32 %v339, %v339
    %v363 = vsub.f32 %v360, %v362
    %v364 = vmax.f32 %v363, 0.0
    %v365 = vld [vmem:[%s4] sm:$0x1]
    %v366 = vld [vmem:[%s4 + $0x1] sm:$0x1]
    %v367 = vadd.f32 %v364, 1e-05
    %v368 = vrsqrt.pop %v367
    %v369 = vmul.f32 %v368, %v367
    %v370 = vmul.f32 %v369, %v368
    %v371 = vmul.f32 0.5, %v370
    %v372 = vsub.f32 1.5, %v371
    %v373 = vmul.f32 %v368, %v372
    %vm374 = vweird.f32 %v367
    %vm375 = vweird.f32 %v368
    %vm376 = vmor %vm374, %vm375
    %v377 = vsel %vm376, %v368, %v373
    %v378 = vmul.f32 %v365, %v377
    %v379 = vperm.slane %v378, 0
    %v380 = vmul.f32 %v319, %v379
    %v381 = vmul.f32 %v339, %v378
    %v382 = vsub.f32 %v366, %v381
    %v383 = vperm.slane %v382, 0
    %v384 = vadd.f32 %v380, %v383
    %v385 = vmax.f32 %v384, 0.0
    %v386 = vld [vmem:[%s5] sm:$0xff]
    %v387 = vld [vmem:[%s5 + $0x8] sm:$0xff]
    %v388 = vld [vmem:[%s5 + $0x10] sm:$0xff]
    %v389 = vld [vmem:[%s5 + $0x18] sm:$0xff]
    %v390 = vld [vmem:[%s5 + $0x20] sm:$0xff]
    %v391 = vld [vmem:[%s5 + $0x28] sm:$0xff]
    %v392 = vld [vmem:[%s5 + $0x30] sm:$0xff]
    %v393 = vld [vmem:[%s5 + $0x38] sm:$0xff]
    %v394 = vld [vmem:[%s5 + $0x40] sm:$0xff]
    %v395 = vld [vmem:[%s5 + $0x48] sm:$0xff]
    %v396 = vld [vmem:[%s5 + $0x50] sm:$0xff]
    %v397 = vld [vmem:[%s5 + $0x58] sm:$0xff]
    %v398 = vld [vmem:[%s5 + $0x60] sm:$0xff]
    %v399 = vld [vmem:[%s5 + $0x68] sm:$0xff]
    %v400 = vld [vmem:[%s5 + $0x70] sm:$0xff]
    %v401 = vld [vmem:[%s5 + $0x78] sm:$0xff]
    %v402 = vld [vmem:[%s6] sm:$0x1]
    %v403 = vperm.slane %v402, 0
    %404 = vmatpush.msra.mxu0 %v401
    %405 = vmatpush.msra.mxu0 %v400
    %406 = vmatpush.msra.mxu0 %v399
    %407 = vmatpush.msra.mxu0 %v398
    %408 = vmatpush.msra.mxu0 %v397
    %409 = vmatpush.msra.mxu0 %v396
    %410 = vmatpush.msra.mxu0 %v395
    %411 = vmatpush.msra.mxu0 %v394
    %412 = vmatpush.msra.mxu0 %v393
    %413 = vmatpush.msra.mxu0 %v392
    %414 = vmatpush.msra.mxu0 %v391
    %415 = vmatpush.msra.mxu0 %v390
    %416 = vmatpush.msra.mxu0 %v389
    %417 = vmatpush.msra.mxu0 %v388
    %418 = vmatpush.msra.mxu0 %v387
    %419 = vmatpush.msra.mxu0 %v386
    %420 = vmatmul.f32.gmra.mxu0 %v385
    %v421 = vpop.f32.mrf.mxu0
    %v422 = vadd.f32 %v403, %v421
    %423 = vdwg.mxu0
    %v424 = vld [vmem:[%s6 + $0x1] sm:$0x1]
    %v425 = vmul.f32 %v422, %v422
    %v426 = vld [vmem:[%s7] sm:$0xff]
    %v427 = vld [vmem:[%s7 + $0x8] sm:$0xff]
    %v428 = vld [vmem:[%s7 + $0x10] sm:$0xff]
    %v429 = vld [vmem:[%s7 + $0x18] sm:$0xf]
    %vm430 = vcmask 228352
    %v432 = vsel %vm430, %v425, 0
    %vm434 = vcmask 1043456
    %v436 = vsel %vm434, %v429, 0
    %438 = vmatpush.msra.mxu0 0.0
    %439 = vmatpush.msra.mxu0 0.0
    %440 = vmatpush.msra.mxu0 0.0
    %441 = vmatpush.msra.mxu0 0.0
    %442 = vmatpush.msra.mxu0 0.0
    %443 = vmatpush.msra.mxu0 0.0
    %444 = vmatpush.msra.mxu0 0.0
    %445 = vmatpush.msra.mxu0 0.0
    %446 = vmatpush.msra.mxu0 0.0
    %447 = vmatpush.msra.mxu0 0.0
    %448 = vmatpush.msra.mxu0 0.0
    %449 = vmatpush.msra.mxu0 0.0
    %450 = vmatpush.msra.mxu0 %v436
    %451 = vmatpush.msra.mxu0 %v428
    %452 = vmatpush.msra.mxu0 %v427
    %453 = vmatpush.msra.mxu0 %v426
    %454 = vmatmul.f32.gmra.mxu0 %v432
    %v455 = vpop.f32.mrf.mxu0
    %v456 = vadd.f32 1e-12, %v455
    %457 = vdwg.mxu0
    %v458 = vrsqrt.pop %v456
    %v459 = vmul.f32 %v458, %v456
    %v460 = vmul.f32 %v459, %v458
    %v461 = vmul.f32 0.5, %v460
    %v462 = vsub.f32 1.5, %v461
    %v463 = vmul.f32 %v458, %v462
    %vm464 = vweird.f32 %v456
    %vm465 = vweird.f32 %v458
    %vm466 = vmor %vm464, %vm465
    %v467 = vsel %vm466, %v458, %v463
    %v468 = vld [vmem:[%s8] sm:$0xf]
    %vm469 = vcmask 31744
    %v471 = vsel %vm469, %v467, 0
    %v474 = vsel %vm434, %v468, 0
    %476 = vmatpush.msra.mxu0 0.0
    %477 = vmatpush.msra.mxu0 0.0
    %478 = vmatpush.msra.mxu0 0.0
    %479 = vmatpush.msra.mxu0 0.0
    %480 = vmatpush.msra.mxu0 0.0
    %481 = vmatpush.msra.mxu0 0.0
    %482 = vmatpush.msra.mxu0 0.0
    %483 = vmatpush.msra.mxu0 0.0
    %484 = vmatpush.msra.mxu0 0.0
    %485 = vmatpush.msra.mxu0 0.0
    %486 = vmatpush.msra.mxu0 0.0
    %487 = vmatpush.msra.mxu0 0.0
    %488 = vmatpush.msra.mxu0 0.0
    %489 = vmatpush.msra.mxu0 0.0
    %490 = vmatpush.msra.mxu0 0.0
    %491 = vmatpush.msra.mxu0 %v474
    %492 = vmatmul.f32.gmra.mxu0 %v471
    %v493 = vpop.f32.mrf.mxu0
    %v494 = vadd.f32 0.0, %v493
    %495 = vdwg.mxu0
    %v496 = vtanh.pop %v422
    %v497 = vperm.slane %v424, 0
    %v498 = vmul.f32 %v496, %v497
    %v499 = vmul.f32 %v422, %v494
    %v500 = vadd.f32 %v498, %v499
    %501 = vst.msk [vmem:[%s9] sm:$0xff] %vm430, %v500
    // Predicated region
    $region42: #{pose_decoder_forward.1} parent=1 // pred_check
      _
    $region43: #{pose_decoder_forward.1} parent=1 // pred_check_branch
      %503 = sbr.rel (0) target = $region45
    $region44: #{pose_decoder_forward.1} parent=1 // pred_region
      _
    $region45: #{pose_decoder_forward.1} parent=1 // pred_fallthru
      _
    // Predicated region
    $region46: #{pose_decoder_forward.1} parent=1 // pred_check
      _
    $region47: #{pose_decoder_forward.1} parent=1 // pred_check_branch
      %505 = sbr.rel (0) target = $region49
    $region48: #{pose_decoder_forward.1} parent=1 // pred_region
      _
    $region49: #{pose_decoder_forward.1} parent=1 // pred_fallthru
      _
    %506 = vsyncpa [#allocation3], 1

</llo_original>
